<compile_context>
chip_gen: v6e
topology: v6e:2x2x1
jax: 0.10.0
libtpu: 0.0.40
codegen_flags: <defaults>
</compile_context>

<pallas_src>
import functools

import jax
import jax.numpy as jnp
from jax.experimental import pallas as pl
from jax.experimental.pallas import tpu as pltpu

_HID = 100       # fc1 output features
_HID_PAD = 128   # lane-aligned hidden width (zero-padded units are inert)


def _round_up(n, m):
    return ((n + m - 1) // m) * m


def _mlp_policy_kernel(x_ref, w1_ref, b1_ref, wh_ref, bh_ref, out_ref, *,
                       action_dim):
    # Layer 1: h = relu(xin @ W1 + b1), f32 accumulate, bf16 MXU operands.
    h = jnp.dot(x_ref[...], w1_ref[...], preferred_element_type=jnp.float32)
    h = jnp.maximum(h + b1_ref[...], 0.0)                     # (bt, Hp) f32

    # Fused heads: one (Hp, 2A) matmul instead of two (Hp, A) matmuls.
    o = jnp.dot(h.astype(wh_ref.dtype), wh_ref[...],
                preferred_element_type=jnp.float32) + bh_ref[...]  # (bt, 2A) f32

    # Lanes [0:A] -> tanh(mean), lanes [A:2A] -> softplus(std) + 1e-5.
    lane = jax.lax.broadcasted_iota(jnp.int32, o.shape, 1)
    mean = jnp.tanh(o)
    # numerically stable softplus
    sp = jnp.maximum(o, 0.0) + jnp.log(1.0 + jnp.exp(-jnp.abs(o))) + 1e-5
    out_ref[...] = jnp.where(lane < action_dim, mean, sp).astype(out_ref.dtype)


def prepare_params(w1, b1, wm, bm, ws, bs, state_dim, compute_dtype=jnp.bfloat16):
    """One-time weight prep (transpose + pad + cast + head fusion). Call ONCE."""
    A = wm.shape[0]
    K = state_dim + 2
    # fc1 weight: (100, K) -> (K, HID_PAD) bf16, zero-padded hidden units.
    w1p = jnp.zeros((K, _HID_PAD), compute_dtype)
    w1p = w1p.at[:, :_HID].set(w1.T.astype(compute_dtype))
    b1p = jnp.zeros((1, _HID_PAD), jnp.float32).at[0, :_HID].set(
        b1.astype(jnp.float32))
    # Fused heads: (HID_PAD, 2A) bf16, [:, :A]=mean head, [:, A:]=std head.
    whp = jnp.zeros((_HID_PAD, 2 * A), compute_dtype)
    whp = whp.at[:_HID, :A].set(wm.T.astype(compute_dtype))
    whp = whp.at[:_HID, A:].set(ws.T.astype(compute_dtype))
    bhp = jnp.concatenate([bm, bs]).reshape(1, 2 * A).astype(jnp.float32)
    return dict(w1=w1p, b1=b1p, wh=whp, bh=bhp)


def _pick_batch_tile(B, batch_tile):
    """Tile choice: amortize per-step overhead, keep >=2 blocks for v7x's
    two TensorCores on medium/large batches, never emit a giant single block."""
    if B >= 2 * batch_tile:
        return batch_tile
    if B >= 2048:
        return _round_up((B + 1) // 2, 8)   # 2 blocks -> both v7x TCs busy
    return _round_up(max(B, 1), 8)          # tiny batch: single small block


def _vmem_limit_bytes(bt):
    # Double-buffered IO blocks (x lane-pads to 128 bf16, packed out to 128 f32)
    # + generous headroom for resident weights / compiler scratch.
    x_blk = bt * 128 * 2
    o_blk = bt * 128 * 4
    return int(min(max(2 * (x_blk + o_blk) + (4 << 20), 16 << 20), 48 << 20))


@functools.partial(jax.jit, static_argnames=("batch_tile",))
def mlp_policy_forward(x, pos, params, batch_tile=8192):
    """x: (B, state_dim) f32, pos: (B, 2) f32 -> (mean, std), each (B, A) f32."""
    B = x.shape[0]
    K, Hp = params["w1"].shape
    A2 = params["wh"].shape[1]
    A = A2 // 2
    cdt = params["w1"].dtype

    # Fold pos into the fc1 input (single bf16 stream, K = state_dim + 2).
    xin = jnp.concatenate([x, pos], axis=1).astype(cdt)

    # Pad-and-slice batch tiling (rows padded with zeros, sliced off below).
    bt = _pick_batch_tile(B, batch_tile)
    Bp = _round_up(B, bt)
    if Bp != B:
        xin = jnp.pad(xin, ((0, Bp - B), (0, 0)))
    nb = Bp // bt

    grid_spec = pltpu.PrefetchScalarGridSpec(
        num_scalar_prefetch=0,
        grid=(nb,),
        in_specs=[
            pl.BlockSpec((bt, K), lambda i: (i, 0)),      # xin
            pl.BlockSpec((K, Hp), lambda i: (0, 0)),      # w1 (VMEM-resident)
            pl.BlockSpec((1, Hp), lambda i: (0, 0)),      # b1
            pl.BlockSpec((Hp, A2), lambda i: (0, 0)),     # fused head weights
            pl.BlockSpec((1, A2), lambda i: (0, 0)),      # fused head biases
        ],
        out_specs=pl.BlockSpec((bt, A2), lambda i: (i, 0)),   # packed [mean|std]
    )

    w_bytes = (K * Hp + Hp * A2) * 2 + (Hp + A2) * 4
    cost = pl.CostEstimate(
        flops=2 * Bp * Hp * (K + A2),
        transcendentals=2 * Bp * A2,                      # tanh + exp per lane
        bytes_accessed=Bp * (K * 2 + A2 * 4) + w_bytes,
    )

    out = pl.pallas_call(
        functools.partial(_mlp_policy_kernel, action_dim=A),
        out_shape=jax.ShapeDtypeStruct((Bp, A2), jnp.float32),
        grid_spec=grid_spec,
        compiler_params=pltpu.CompilerParams(
            dimension_semantics=("parallel",),
            vmem_limit_bytes=_vmem_limit_bytes(bt),
        ),
        cost_estimate=cost,
    )(xin, params["w1"], params["b1"], params["wh"], params["bh"])

    mean = out[:B, :A]
    std = out[:B, A:]
    return mean, std


def init_params(key, state_dim=64, action_dim=2):
    """Deterministic init matching the PyTorch module's init scheme."""
    fan_in1 = state_dim + 2
    ks = jax.random.split(key, 6)
    # fc1: kaiming_normal_; bias: default uniform(+-1/sqrt(fan_in))
    w1 = jax.random.normal(ks[0], (100, fan_in1), jnp.float32) * jnp.sqrt(2.0 / fan_in1)
    b1 = jax.random.uniform(ks[1], (100,), jnp.float32,
                            -1.0 / jnp.sqrt(fan_in1), 1.0 / jnp.sqrt(fan_in1))
    # fc_mean / fc_std: xavier_normal_; biases: default uniform(+-1/sqrt(100))
    xstd = jnp.sqrt(2.0 / (100 + action_dim))
    wm = jax.random.normal(ks[2], (action_dim, 100), jnp.float32) * xstd
    bm = jax.random.uniform(ks[3], (action_dim,), jnp.float32, -0.1, 0.1)
    ws = jax.random.normal(ks[4], (action_dim, 100), jnp.float32) * xstd
    bs = jax.random.uniform(ks[5], (action_dim,), jnp.float32, -0.1, 0.1)
    return w1, b1, wm, bm, ws, bs


def _reference(x, pos, w1, b1, wm, bm, ws, bs):
    xin = jnp.concatenate([x, pos], axis=1)
    h = jnp.maximum(xin @ w1.T + b1, 0.0)
    mean = jnp.tanh(h @ wm.T + bm)
    std = jnp.logaddexp(h @ ws.T + bs, 0.0) + 1e-5
    return mean, std


if __name__ == "__main__":
    key = jax.random.PRNGKey(0)
    kx, kp, kw = jax.random.split(key, 3)

    state_dim, action_dim, B = 64, 2, 4
    x = jax.random.normal(kx, (B, state_dim), jnp.float32)
    pos = jax.random.normal(kp, (B, 2), jnp.float32)

    w1, b1, wm, bm, ws, bs = init_params(kw, state_dim, action_dim)

    # Hoisted one-time weight prep (transpose + pad + head fusion + bf16 cast).
    params = prepare_params(w1, b1, wm, bm, ws, bs, state_dim,
                            compute_dtype=jnp.bfloat16)

    mean, std = mlp_policy_forward(x, pos, params)
    jax.block_until_ready((mean, std))

    mean_ref, std_ref = _reference(x, pos, w1, b1, wm, bm, ws, bs)
    assert mean.shape == (B, action_dim) and std.shape == (B, action_dim)
    # bf16 MXU operands / f32 accumulate -> loosened tolerance vs. f32 reference.
    assert jnp.allclose(mean, mean_ref, atol=5e-2, rtol=5e-2)
    assert jnp.allclose(std, std_ref, atol=5e-2, rtol=5e-2)

    # Second (still small) batch exercising the pad-and-slice path (B % 8 != 0).
    B2 = 37
    x2 = jax.random.normal(kx, (B2, state_dim), jnp.float32)
    pos2 = jax.random.normal(kp, (B2, 2), jnp.float32)
    mean2, std2 = mlp_policy_forward(x2, pos2, params)
    jax.block_until_ready((mean2, std2))
    mean2_ref, std2_ref = _reference(x2, pos2, w1, b1, wm, bm, ws, bs)
    assert mean2.shape == (B2, action_dim) and std2.shape == (B2, action_dim)
    assert jnp.allclose(mean2, mean2_ref, atol=5e-2, rtol=5e-2)
    assert jnp.allclose(std2, std2_ref, atol=5e-2, rtol=5e-2)

    # TODO(synk): choose_action's Normal(mean, std).sample() is host-side policy
    # sampling, not part of forward(); left to jax.random outside the kernel.
    print("KERNEL_OK")
</pallas_src>

<mosaic_0001>
module attributes {stable_mosaic.version = 11 : i64} {
  func.func @_mlp_policy_kernel(%arg0: i32, %arg1: memref<8x66xbf16, #tpu.memory_space<vmem>>, %arg2: memref<66x128xbf16, #tpu.memory_space<vmem>>, %arg3: memref<1x128xf32, #tpu.memory_space<vmem>>, %arg4: memref<128x4xbf16, #tpu.memory_space<vmem>>, %arg5: memref<1x4xf32, #tpu.memory_space<vmem>>, %arg6: memref<8x4xf32, #tpu.memory_space<vmem>>) attributes {dimension_semantics = [#tpu.dimension_semantics<parallel>], iteration_bounds = array<i64: 1>, scalar_prefetch = 0 : i64, scratch_operands = 0 : i64, tpu.core_type = #tpu.core_type<tc>, window_params = [{transform_indices = @transform_0, window_bounds = array<i64: 8, 66>}, {pipeline_mode = #tpu.pipeline_mode<synchronous>, transform_indices = @transform_1, window_bounds = array<i64: 66, 128>}, {pipeline_mode = #tpu.pipeline_mode<synchronous>, transform_indices = @transform_2, window_bounds = array<i64: 1, 128>}, {pipeline_mode = #tpu.pipeline_mode<synchronous>, transform_indices = @transform_3, window_bounds = array<i64: 128, 4>}, {pipeline_mode = #tpu.pipeline_mode<synchronous>, transform_indices = @transform_4, window_bounds = array<i64: 1, 4>}, {transform_indices = @transform_5, window_bounds = array<i64: 8, 4>}]} {
    %c0 = arith.constant 0 : index
    %c0_0 = arith.constant 0 : index
    %0 = vector.load %arg1[%c0, %c0_0] : memref<8x66xbf16, #tpu.memory_space<vmem>>, vector<8x66xbf16>
    %c0_1 = arith.constant 0 : index
    %c0_2 = arith.constant 0 : index
    %1 = vector.load %arg2[%c0_1, %c0_2] : memref<66x128xbf16, #tpu.memory_space<vmem>>, vector<66x128xbf16>
    %cst = arith.constant dense<0.000000e+00> : vector<8x128xf32>
    %2 = tpu.matmul %0, %1, %cst {dimension_numbers = #tpu.dot_dimension_numbers<[1], [0], [0], [1], [0, 0, 1, 1], [], []>} : vector<8x66xbf16>, vector<66x128xbf16>, vector<8x128xf32> -> vector<8x128xf32>
    %c0_3 = arith.constant 0 : index
    %c0_4 = arith.constant 0 : index
    %3 = vector.load %arg3[%c0_3, %c0_4] : memref<1x128xf32, #tpu.memory_space<vmem>>, vector<1x128xf32>
    %4 = vector.broadcast %3 : vector<1x128xf32> to vector<8x128xf32>
    %5 = arith.addf %2, %4 : vector<8x128xf32>
    %cst_5 = arith.constant 0.000000e+00 : f32
    %6 = vector.broadcast %cst_5 : f32 to vector<8x128xf32>
    %7 = arith.maximumf %5, %6 : vector<8x128xf32>
    %8 = arith.truncf %7 : vector<8x128xf32> to vector<8x128xbf16>
    %c0_6 = arith.constant 0 : index
    %c0_7 = arith.constant 0 : index
    %9 = vector.load %arg4[%c0_6, %c0_7] : memref<128x4xbf16, #tpu.memory_space<vmem>>, vector<128x4xbf16>
    %cst_8 = arith.constant dense<0.000000e+00> : vector<8x4xf32>
    %10 = tpu.matmul %8, %9, %cst_8 {dimension_numbers = #tpu.dot_dimension_numbers<[1], [0], [0], [1], [0, 0, 1, 1], [], []>} : vector<8x128xbf16>, vector<128x4xbf16>, vector<8x4xf32> -> vector<8x4xf32>
    %c0_9 = arith.constant 0 : index
    %c0_10 = arith.constant 0 : index
    %11 = vector.load %arg5[%c0_9, %c0_10] : memref<1x4xf32, #tpu.memory_space<vmem>>, vector<1x4xf32>
    %12 = vector.broadcast %11 : vector<1x4xf32> to vector<8x4xf32>
    %13 = arith.addf %10, %12 : vector<8x4xf32>
    %14 = tpu.iota {dimensions = array<i32: 1>} : vector<8x4xi32>
    %15 = math.tanh %13 : vector<8x4xf32>
    %cst_11 = arith.constant 0.000000e+00 : f32
    %16 = vector.broadcast %cst_11 : f32 to vector<8x4xf32>
    %17 = arith.maximumf %13, %16 : vector<8x4xf32>
    %18 = math.absf %13 : vector<8x4xf32>
    %cst_12 = arith.constant 0.000000e+00 : f32
    %19 = vector.broadcast %cst_12 : f32 to vector<8x4xf32>
    %20 = arith.subf %19, %18 : vector<8x4xf32>
    %21 = math.exp %20 : vector<8x4xf32>
    %cst_13 = arith.constant 1.000000e+00 : f32
    %22 = vector.broadcast %cst_13 : f32 to vector<8x4xf32>
    %23 = arith.addf %22, %21 : vector<8x4xf32>
    %24 = math.log %23 : vector<8x4xf32>
    %25 = arith.addf %17, %24 : vector<8x4xf32>
    %cst_14 = arith.constant 9.99999974E-6 : f32
    %26 = vector.broadcast %cst_14 : f32 to vector<8x4xf32>
    %27 = arith.addf %25, %26 : vector<8x4xf32>
    %c2_i32 = arith.constant 2 : i32
    %28 = vector.broadcast %c2_i32 : i32 to vector<8x4xi32>
    %29 = arith.cmpi slt, %14, %28 : vector<8x4xi32>
    %30 = arith.select %29, %15, %27 : vector<8x4xi1>, vector<8x4xf32>
    %c0_15 = arith.constant 0 : index
    %c0_16 = arith.constant 0 : index
    %31 = vector.load %arg6[%c0_15, %c0_16] : memref<8x4xf32, #tpu.memory_space<vmem>>, vector<8x4xf32>
    tpu.vector_store %arg6[%c0_15, %c0_16], %30 {strides = array<i32>} : memref<8x4xf32, #tpu.memory_space<vmem>>, vector<8x4xf32>,
    return
  }
  func.func @transform_0(%arg0: i32) -> (i32, i32) {
    %c0_i32 = arith.constant 0 : i32
    %c0_i32_0 = arith.constant 0 : i32
    return %arg0, %c0_i32 : i32, i32
  }
  func.func @transform_1(%arg0: i32) -> (i32, i32) {
    %c0_i32 = arith.constant 0 : i32
    %c0_i32_0 = arith.constant 0 : i32
    %c0_i32_1 = arith.constant 0 : i32
    return %c0_i32, %c0_i32_0 : i32, i32
  }
  func.func @transform_2(%arg0: i32) -> (i32, i32) {
    %c0_i32 = arith.constant 0 : i32
    %c0_i32_0 = arith.constant 0 : i32
    %c0_i32_1 = arith.constant 0 : i32
    return %c0_i32, %c0_i32_0 : i32, i32
  }
  func.func @transform_3(%arg0: i32) -> (i32, i32) {
    %c0_i32 = arith.constant 0 : i32
    %c0_i32_0 = arith.constant 0 : i32
    %c0_i32_1 = arith.constant 0 : i32
    return %c0_i32, %c0_i32_0 : i32, i32
  }
  func.func @transform_4(%arg0: i32) -> (i32, i32) {
    %c0_i32 = arith.constant 0 : i32
    %c0_i32_0 = arith.constant 0 : i32
    %c0_i32_1 = arith.constant 0 : i32
    return %c0_i32, %c0_i32_0 : i32, i32
  }
  func.func @transform_5(%arg0: i32) -> (i32, i32) {
    %c0_i32 = arith.constant 0 : i32
    %c0_i32_0 = arith.constant 0 : i32
    return %arg0, %c0_i32 : i32, i32
  }
}

</mosaic_0001>

<llo_original>
// kernel: mlp_policy_forward.1
$region0: #{mlp_policy_forward.1}
  #allocation0 [shape = 'u32[]', space=smem, size = 0x4, offset = 0x4, fixed_abs, tag = 'smem constant byte address 0x4 - core index']
  #allocation1 [shape = 'u32[144,128]{1,0:T(1,128)}', space=vmem, size = 0x12000, scoped, tag = 'internal scratch']
  %s0 = inlined_call_operand.vmem [shape: bf16[8,66], index: 0, kind: input, shape index: {}]
  %s1 = inlined_call_operand.vmem [shape: bf16[66,128], index: 1, kind: input, shape index: {}]
  %s2 = inlined_call_operand.vmem [shape: f32[1,128], index: 2, kind: input, shape index: {}]
  %s3 = inlined_call_operand.vmem [shape: bf16[128,4], index: 3, kind: input, shape index: {}]
  %s4 = inlined_call_operand.vmem [shape: f32[1,4], index: 4, kind: input, shape index: {}]
  %s5 = inlined_call_operand.vmem [shape: f32[8,4], index: 5, kind: output, shape index: {}]
  %s6 = sld [smem:[#allocation0]]
  $region30: #{mlp_policy_forward.1} parent=0
    _
  %s8 = ssub.s32 1, %s6
  %s9 = scalar_select 0, %s8, %s6
  // Predicated region
  $region2: #{mlp_policy_forward.1} parent=0 // pred_check
    _
  $region3: #{mlp_policy_forward.1} parent=0 // pred_check_branch
    %11 = sbr.rel (0) target = $region5
  $region4: #{mlp_policy_forward.1} parent=0 // pred_region
    _
  $region5: #{mlp_policy_forward.1} parent=0 // pred_fallthru
    _
  // Predicated region
  $region6: #{mlp_policy_forward.1} parent=0 // pred_check
    _
  $region7: #{mlp_policy_forward.1} parent=0 // pred_check_branch
    %13 = sbr.rel (0) target = $region9
  $region8: #{mlp_policy_forward.1} parent=0 // pred_region
    _
  $region9: #{mlp_policy_forward.1} parent=0 // pred_fallthru
    _
  // Predicated region
  $region10: #{mlp_policy_forward.1} parent=0 // pred_check
    _
  $region11: #{mlp_policy_forward.1} parent=0 // pred_check_branch
    %15 = sbr.rel (0) target = $region13
  $region12: #{mlp_policy_forward.1} parent=0 // pred_region
    _
  $region13: #{mlp_policy_forward.1} parent=0 // pred_fallthru
    _
  // Predicated region
  $region14: #{mlp_policy_forward.1} parent=0 // pred_check
    _
  $region15: #{mlp_policy_forward.1} parent=0 // pred_check_branch
    %17 = sbr.rel (0) target = $region17
  $region16: #{mlp_policy_forward.1} parent=0 // pred_region
    _
  $region17: #{mlp_policy_forward.1} parent=0 // pred_fallthru
    _
  // Predicated region
  $region18: #{mlp_policy_forward.1} parent=0 // pred_check
    _
  $region19: #{mlp_policy_forward.1} parent=0 // pred_check_branch
    %19 = sbr.rel (0) target = $region21
  $region20: #{mlp_policy_forward.1} parent=0 // pred_region
    _
  $region21: #{mlp_policy_forward.1} parent=0 // pred_fallthru
    _
  %v21 = vld [vmem:[%s0] sm:$0xf]
  %v22 = vld [vmem:[%s1] sm:$0xf]
  %v23 = vld [vmem:[%s1 + $0x4] sm:$0xf]
  %v24 = vld [vmem:[%s1 + $0x8] sm:$0xf]
  %v25 = vld [vmem:[%s1 + $0xc] sm:$0xf]
  %v26 = vld [vmem:[%s1 + $0x10] sm:$0xf]
  %v27 = vld [vmem:[%s1 + $0x14] sm:$0xf]
  %v28 = vld [vmem:[%s1 + $0x18] sm:$0xf]
  %v29 = vld [vmem:[%s1 + $0x1c] sm:$0xf]
  %v30 = vld [vmem:[%s1 + $0x20] sm:$0x1]
  %v31 = vld [vmem:[%s2] sm:$0x1]
  %v33 = vlaneseq
  %v34 = vshrl.u32 %v33, 7
  %v35 = vsub.s32 0, %v34
  %v36 = vrot.slane %v31, %v35
  %v47 = vunpack.c.l.b16 %v22
  %v48 = vunpack.c.l.b16 %v23
  %v49 = vunpack.c.l.b16 %v24
  %v50 = vunpack.c.l.b16 %v25
  %v51 = vunpack.c.l.b16 %v26
  %v52 = vunpack.c.l.b16 %v27
  %v53 = vunpack.c.l.b16 %v28
  %v54 = vunpack.c.l.b16 %v29
  %v55 = vunpack.c.l.b16 %v30
  %v56 = vpack.c.b16 %v48, %v47
  %v57 = vpack.c.b16 %v50, %v49
  %v58 = vpack.c.b16 %v52, %v51
  %v59 = vpack.c.b16 %v54, %v53
  %v60 = vpack.c.b16 %v55, %v55
  %vm65 = vcmask 539648
  %v67 = vsel %vm65, %v21, 0
  %vm69 = vcmask 1040384
  %v71 = vsel %vm69, %v60, 0
  %73 = vmatprep.subr.bf16.mxu0 0
  %74 = vmatpush1.bf16.msra.mxu0 0
  %75 = vmatprep.subr.bf16.mxu0 0
  %76 = vmatpush1.bf16.msra.mxu0 0
  %77 = vmatprep.subr.bf16.mxu0 0
  %78 = vmatpush1.bf16.msra.mxu0 0
  %79 = vmatprep.subr.bf16.mxu0 0
  %80 = vmatpush1.bf16.msra.mxu0 %v71
  %81 = vmatprep.subr.bf16.mxu0 0
  %82 = vmatpush1.bf16.msra.mxu0 %v59
  %83 = vmatprep.subr.bf16.mxu0 0
  %84 = vmatpush1.bf16.msra.mxu0 %v58
  %85 = vmatprep.subr.bf16.mxu0 0
  %86 = vmatpush1.bf16.msra.mxu0 %v57
  %87 = vmatprep.subr.bf16.mxu0 0
  %88 = vmatpush1.bf16.msra.mxu0 %v56
  %89 = vmatprep.subr.bf16.mxu0 0
  %90 = vmatpush2.bf16.msra.mxu0 0
  %91 = vmatprep.subr.bf16.mxu0 0
  %92 = vmatpush2.bf16.msra.mxu0 0
  %93 = vmatprep.subr.bf16.mxu0 0
  %94 = vmatpush2.bf16.msra.mxu0 0
  %95 = vmatprep.subr.bf16.mxu0 0
  %96 = vmatpush2.bf16.msra.mxu0 0
  %97 = vmatprep.subr.bf16.mxu0 0
  %98 = vmatpush2.bf16.msra.mxu0 0
  %99 = vmatprep.subr.bf16.mxu0 0
  %100 = vmatpush2.bf16.msra.mxu0 0
  %101 = vmatprep.subr.bf16.mxu0 0
  %102 = vmatpush2.bf16.msra.mxu0 0
  %103 = vmatprep.subr.bf16.mxu0 0
  %104 = vmatpush2.bf16.msra.mxu0 0
  %105 = vmatprep.mubr.bf16.mxu0 0
  %106 = vmatmul.mubr.bf16.gmra.mxu0 %v67
  %v107 = vpop.f32.mrf.mxu0
  %v108 = vadd.f32 %v36, %v107
  %v109 = vpop.f32.mrf.mxu0
  %v110 = vpop.f32.mrf.mxu0
  %v111 = vpop.f32.mrf.mxu0
  %112 = vdwg.mxu0
  %v113 = vmax.f32 %v108, 0.0
  %v114 = vpack.c.bf16 %v113, %v113
  %v115 = vld [vmem:[%s3] sm:$0xf]
  %v116 = vld [vmem:[%s3 + $0x4] sm:$0xf]
  %v117 = vld [vmem:[%s3 + $0x8] sm:$0xf]
  %v118 = vld [vmem:[%s3 + $0xc] sm:$0xf]
  %v119 = vld [vmem:[%s3 + $0x10] sm:$0xf]
  %v120 = vld [vmem:[%s3 + $0x14] sm:$0xf]
  %v121 = vld [vmem:[%s3 + $0x18] sm:$0xf]
  %v122 = vld [vmem:[%s3 + $0x1c] sm:$0xf]
  %v123 = vld [vmem:[%s3 + $0x20] sm:$0xf]
  %v124 = vld [vmem:[%s3 + $0x24] sm:$0xf]
  %v125 = vld [vmem:[%s3 + $0x28] sm:$0xf]
  %v126 = vld [vmem:[%s3 + $0x2c] sm:$0xf]
  %v127 = vld [vmem:[%s3 + $0x30] sm:$0xf]
  %v128 = vld [vmem:[%s3 + $0x34] sm:$0xf]
  %v129 = vld [vmem:[%s3 + $0x38] sm:$0xf]
  %v130 = vld [vmem:[%s3 + $0x3c] sm:$0xf]
  %v131 = vld [vmem:[%s4] sm:$0x1]
  %v133 = vlaneseq
  %v134 = vshrl.u32 %v133, 7
  %v135 = vsub.s32 0, %v134
  %v136 = vrot.slane %v131, %v135
  %v154 = vunpack.c.l.b16 %v115
  %v155 = vunpack.c.l.b16 %v116
  %v156 = vunpack.c.l.b16 %v117
  %v157 = vunpack.c.l.b16 %v118
  %v158 = vunpack.c.l.b16 %v119
  %v159 = vunpack.c.l.b16 %v120
  %v160 = vunpack.c.l.b16 %v121
  %v161 = vunpack.c.l.b16 %v122
  %v162 = vunpack.c.l.b16 %v123
  %v163 = vunpack.c.l.b16 %v124
  %v164 = vunpack.c.l.b16 %v125
  %v165 = vunpack.c.l.b16 %v126
  %v166 = vunpack.c.l.b16 %v127
  %v167 = vunpack.c.l.b16 %v128
  %v168 = vunpack.c.l.b16 %v129
  %v169 = vunpack.c.l.b16 %v130
  %v170 = vpack.c.b16 %v155, %v154
  %v171 = vpack.c.b16 %v157, %v156
  %v172 = vpack.c.b16 %v159, %v158
  %v173 = vpack.c.b16 %v161, %v160
  %v174 = vpack.c.b16 %v163, %v162
  %v175 = vpack.c.b16 %v165, %v164
  %v176 = vpack.c.b16 %v167, %v166
  %v177 = vpack.c.b16 %v169, %v168
  %186 = vmatprep.subr.bf16.mxu0 0
  %187 = vmatpush1.bf16.msra.mxu0 %v177
  %188 = vmatprep.subr.bf16.mxu0 0
  %189 = vmatpush1.bf16.msra.mxu0 %v176
  %190 = vmatprep.subr.bf16.mxu0 0
  %191 = vmatpush1.bf16.msra.mxu0 %v175
  %192 = vmatprep.subr.bf16.mxu0 0
  %193 = vmatpush1.bf16.msra.mxu0 %v174
  %194 = vmatprep.subr.bf16.mxu0 0
  %195 = vmatpush1.bf16.msra.mxu0 %v173
  %196 = vmatprep.subr.bf16.mxu0 0
  %197 = vmatpush1.bf16.msra.mxu0 %v172
  %198 = vmatprep.subr.bf16.mxu0 0
  %199 = vmatpush1.bf16.msra.mxu0 %v171
  %200 = vmatprep.subr.bf16.mxu0 0
  %201 = vmatpush1.bf16.msra.mxu0 %v170
  %202 = vmatprep.subr.bf16.mxu0 0
  %203 = vmatpush2.bf16.msra.mxu0 0
  %204 = vmatprep.subr.bf16.mxu0 0
  %205 = vmatpush2.bf16.msra.mxu0 0
  %206 = vmatprep.subr.bf16.mxu0 0
  %207 = vmatpush2.bf16.msra.mxu0 0
  %208 = vmatprep.subr.bf16.mxu0 0
  %209 = vmatpush2.bf16.msra.mxu0 0
  %210 = vmatprep.subr.bf16.mxu0 0
  %211 = vmatpush2.bf16.msra.mxu0 0
  %212 = vmatprep.subr.bf16.mxu0 0
  %213 = vmatpush2.bf16.msra.mxu0 0
  %214 = vmatprep.subr.bf16.mxu0 0
  %215 = vmatpush2.bf16.msra.mxu0 0
  %216 = vmatprep.subr.bf16.mxu0 0
  %217 = vmatpush2.bf16.msra.mxu0 0
  %218 = vmatprep.mubr.bf16.mxu0 0
  %219 = vmatmul.mubr.bf16.gmra.mxu0 %v114
  %v220 = vpop.f32.mrf.mxu0
  %v221 = vadd.f32 %v136, %v220
  %v222 = vpop.f32.mrf.mxu0
  %v223 = vpop.f32.mrf.mxu0
  %v224 = vpop.f32.mrf.mxu0
  %225 = vdwg.mxu0
  %v226 = vlaneseq
  %v227 = vand.u32 %v226, 127
  %v228 = vtanh.pop %v221
  %v229 = vmax.f32 %v221, 0.0
  %v230 = vand.u32 2147483647, %v221
  %v231 = vsub.f32 0.0, %v230
  %v232 = vmul.f32 %v231, 1.442695
  %v233 = vpow.pop %v232
  %v234 = vadd.f32 %v233, 1.0
  %v235 = vlog2.pop %v234
  %v236 = vmul.f32 %v235, 0.6931472
  %v237 = vadd.f32 %v229, %v236
  %v238 = vadd.f32 %v237, 1e-05
  %vm239 = vcmp.lt.s32.totalorder %v227, 2
  %v240 = vsel %vm239, %v228, %v238
  %vm241 = vcmask 31744
  %242 = vst.msk [vmem:[%s5] sm:$0xff] %vm241, %v240
  // Predicated region
  $region22: #{mlp_policy_forward.1} parent=0 // pred_check
    _
  $region23: #{mlp_policy_forward.1} parent=0 // pred_check_branch
    %244 = sbr.rel (0) target = $region25
  $region24: #{mlp_policy_forward.1} parent=0 // pred_region
    _
  $region25: #{mlp_policy_forward.1} parent=0 // pred_fallthru
    _
  // Predicated region
  $region26: #{mlp_policy_forward.1} parent=0 // pred_check
    _
  $region27: #{mlp_policy_forward.1} parent=0 // pred_check_branch
    %246 = sbr.rel (0) target = $region29
  $region28: #{mlp_policy_forward.1} parent=0 // pred_region
    _
  $region29: #{mlp_policy_forward.1} parent=0 // pred_fallthru
    _

</llo_original>
